<compile_context>
chip_gen: v5e
topology: v5e:2x2
jax: 0.10.0
libtpu: 0.0.40
codegen_flags: <defaults>
</compile_context>

<pallas_src>
import numpy as np
import jax
import jax.numpy as jnp
from jax.experimental import pallas as pl
from jax.experimental.pallas import tpu as pltpu


def _round_up(x, m):
    return ((x + m - 1) // m) * m


def _make_criterion_kernel(q_total, eos_coef):
    """Builds the reduction kernel.  q_total (real proposal count before padding) and
    eos_coef (weight of the no-object class 0) are compile-time constants."""

    def kernel(logits_ref, ppts_ref, tpts_ref, tcls_ref, acc_ref):
        qi = pl.program_id(0)

        @pl.when(qi == 0)
        def _():
            acc_ref[0] = jnp.float32(0.0)   # CE numerator   sum(w * nll)
            acc_ref[1] = jnp.float32(0.0)   # CE denominator sum(w)
            acc_ref[2] = jnp.float32(0.0)   # point-loss numerator sum((p - t)^2) over matches

        logits = logits_ref[...].astype(jnp.float32)          # [B, C, TQ]
        tcls = tcls_ref[...]                                   # [B, TQ] int32
        B, C, TQ = logits.shape

        # Valid-query mask: the wrapper pads Q up to a multiple of the tile size.
        col = jax.lax.broadcasted_iota(jnp.int32, (B, TQ), 1) + qi * TQ
        valid = (col < q_total).astype(jnp.float32)            # [B, TQ]

        # Matched proposals carry a nonzero class label (class 0 == no-object in P2PNet).
        is_obj = tcls != 0                                      # [B, TQ]

        if C == 2:
            # Pairwise log-sum-exp + direct selects: no one-hot, no padded-lane reduction.
            l0 = logits[:, 0, :]
            l1 = logits[:, 1, :]
            lse = jnp.maximum(l0, l1) + jnp.log(1.0 + jnp.exp(-jnp.abs(l0 - l1)))
            tgt_logit = jnp.where(is_obj, l1, l0)
        else:
            # General C: reductions over the small C (sublane) axis, Q stays lane-dense.
            mx = jnp.max(logits, axis=1)
            lse = mx + jnp.log(jnp.sum(jnp.exp(logits - mx[:, None, :]), axis=1))
            onehot = (jax.lax.broadcasted_iota(jnp.int32, logits.shape, 1)
                      == tcls[:, None, :]).astype(jnp.float32)
            tgt_logit = jnp.sum(onehot * logits, axis=1)

        nll = lse - tgt_logit                                   # [B, TQ]
        # empty_weight = ones(C) with weight[0] = eos_coef  ->  weight[target] via select.
        w = jnp.where(is_obj, 1.0, eos_coef) * valid            # [B, TQ]
        acc_ref[0] = acc_ref[0] + jnp.sum(w * nll)
        acc_ref[1] = acc_ref[1] + jnp.sum(w)

        # Point loss: squared error over matched proposals only.
        diff = ppts_ref[...].astype(jnp.float32) - tpts_ref[...].astype(jnp.float32)  # [B, P, TQ]
        m = (is_obj.astype(jnp.float32) * valid)[:, None, :]
        acc_ref[2] = acc_ref[2] + jnp.sum(m * diff * diff)

    return kernel


def set_criterion_crowd_losses(pred_logits, pred_points, target_classes,
                               tgt_points_scat, eos_coef, num_boxes, tile_q=2048):
    """pred_logits [B,Q,C], pred_points [B,Q,P], target_classes [B,Q] int (0 = no-object),
    tgt_points_scat [B,Q,P].  Returns the (unweighted) loss_ce / loss_points scalars."""
    B, Q, C = pred_logits.shape
    P = pred_points.shape[-1]

    # ---- lane-dense relayout: Q on the last (lane) axis ----
    logits_t = jnp.transpose(pred_logits, (0, 2, 1))        # [B, C, Q]
    ppts_t = jnp.transpose(pred_points, (0, 2, 1))          # [B, P, Q]
    tpts_t = jnp.transpose(tgt_points_scat, (0, 2, 1))      # [B, P, Q]
    tcls = target_classes.astype(jnp.int32)                 # [B, Q]

    # ---- pad Q to a multiple of the tile size (kernel masks padded columns) ----
    qp = _round_up(Q, 128)
    tq = min(_round_up(tile_q, 128), qp)
    qp = _round_up(qp, tq)
    pad = qp - Q
    if pad:
        logits_t = jnp.pad(logits_t, ((0, 0), (0, 0), (0, pad)))
        ppts_t = jnp.pad(ppts_t, ((0, 0), (0, 0), (0, pad)))
        tpts_t = jnp.pad(tpts_t, ((0, 0), (0, 0), (0, pad)))
        tcls = jnp.pad(tcls, ((0, 0), (0, pad)))

    grid = (qp // tq,)
    acc = pl.pallas_call(
        _make_criterion_kernel(Q, float(eos_coef)),
        out_shape=jax.ShapeDtypeStruct((3,), jnp.float32),
        grid=grid,
        in_specs=[
            pl.BlockSpec((B, C, tq), lambda q: (0, 0, q)),
            pl.BlockSpec((B, P, tq), lambda q: (0, 0, q)),
            pl.BlockSpec((B, P, tq), lambda q: (0, 0, q)),
            pl.BlockSpec((B, tq), lambda q: (0, q)),
        ],
        out_specs=pl.BlockSpec((3,), lambda q: (0,),
                               memory_space=pltpu.MemorySpace.SMEM),
        compiler_params=pltpu.CompilerParams(
            dimension_semantics=("arbitrary",)),
    )(logits_t, ppts_t, tpts_t, tcls)

    # Exact divisions on the raw partial sums (kept out of the kernel on purpose).
    loss_ce = acc[0] / acc[1]
    loss_pts = acc[2] / jnp.float32(num_boxes)
    return {'loss_ce': loss_ce, 'loss_points': loss_pts}


def greedy_matcher(outputs, targets):
    """Simple deterministic point/class cost matcher (stands in for HungarianMatcher_Crowd).
    Returns list of (src_idx, tgt_idx) per batch element, like the PyTorch matcher."""
    # TODO(synk): exact Hungarian assignment; greedy per-target argmin approximation used here.
    probs = np.asarray(jax.nn.softmax(outputs['pred_logits'], axis=-1))
    pts = np.asarray(outputs['pred_points'])
    indices = []
    for b, t in enumerate(targets):
        tgt_pts = np.asarray(t['point'], dtype=np.float32)
        tgt_lbl = np.asarray(t['labels']).reshape(-1).astype(np.int64)
        n_t, Q = tgt_pts.shape[0], pts.shape[1]
        cost = (np.linalg.norm(pts[b][:, None, :] - tgt_pts[None, :, :], axis=-1)
                - probs[b][:, tgt_lbl])                      # [Q, Nt]
        used = np.zeros(Q, dtype=bool)
        src_idx, tgt_idx = [], []
        for j in range(n_t):
            c = cost[:, j].copy()
            c[used] = np.inf
            i = int(np.argmin(c))
            used[i] = True
            src_idx.append(i)
            tgt_idx.append(j)
        indices.append((np.asarray(src_idx, np.int64), np.asarray(tgt_idx, np.int64)))
    return indices


class SetCriterionCrowd:
    """JAX/Pallas port of SetCriterion_Crowd.forward (losses: 'labels', 'points').
    NOTE: matched targets are assumed to carry nonzero labels (class 0 = no-object),
    as in P2PNet crowd counting, so the match mask is derived as (target_class != 0)."""

    def __init__(self, num_classes, matcher, weight_dict, eos_coef, losses):
        self.num_classes = num_classes
        self.matcher = matcher
        self.weight_dict = weight_dict
        self.eos_coef = eos_coef
        self.losses = losses
        ew = np.ones((num_classes,), dtype=np.float32)
        ew[0] = eos_coef
        self.empty_weight = ew

    def forward(self, outputs, targets):
        pred_logits = np.asarray(outputs['pred_logits'], dtype=np.float32)
        pred_points = np.asarray(outputs['pred_points'], dtype=np.float32)
        indices = self.matcher(outputs, targets)

        B, Q, C = pred_logits.shape
        P = pred_points.shape[-1]
        target_classes = np.zeros((B, Q), dtype=np.int32)          # no-object = class 0
        tgt_pts_scat = np.zeros((B, Q, P), dtype=np.float32)
        for b, (t, (src, tgt)) in enumerate(zip(targets, indices)):
            lbl = np.asarray(t['labels']).reshape(-1)
            pts = np.asarray(t['point'], dtype=np.float32)
            target_classes[b, src] = lbl[tgt]
            tgt_pts_scat[b, src] = pts[tgt]

        num_points = float(sum(len(np.asarray(t['labels']).reshape(-1)) for t in targets))
        num_boxes = max(num_points / 1.0, 1.0)                      # world_size == 1

        raw = set_criterion_crowd_losses(
            jnp.asarray(pred_logits), jnp.asarray(pred_points),
            jnp.asarray(target_classes), jnp.asarray(tgt_pts_scat),
            self.eos_coef, num_boxes)

        losses = {}
        if 'labels' in self.losses:
            losses['loss_ce'] = raw['loss_ce']
        if 'points' in self.losses:
            losses['loss_points'] = raw['loss_points']
        return losses


if __name__ == "__main__":
    key = jax.random.PRNGKey(0)
    B, Q, C, P = 2, 8, 2, 2   # batch, proposals, num_classes (incl. no-object), point dim

    k1, k2, k3, k4 = jax.random.split(key, 4)
    pred_logits = jax.random.normal(k1, (B, Q, C), dtype=jnp.float32)
    pred_points = jax.random.uniform(k2, (B, Q, P), dtype=jnp.float32) * 16.0

    targets = [
        {'labels': np.ones((3,), dtype=np.int64),
         'point': np.asarray(jax.random.uniform(k3, (3, P)) * 16.0)},
        {'labels': np.ones((5,), dtype=np.int64),
         'point': np.asarray(jax.random.uniform(k4, (5, P)) * 16.0)},
    ]

    criterion = SetCriterionCrowd(
        num_classes=C, matcher=greedy_matcher,
        weight_dict={'loss_ce': 1.0, 'loss_points': 0.0002},
        eos_coef=0.5, losses=['labels', 'points'])

    losses = criterion.forward(
        {'pred_logits': pred_logits, 'pred_points': pred_points}, targets)
    jax.block_until_ready(losses['loss_ce'])
    jax.block_until_ready(losses['loss_points'])

    # ---- pure NumPy/JAX reference for verification ----
    indices = greedy_matcher({'pred_logits': pred_logits, 'pred_points': pred_points}, targets)
    logits_np = np.asarray(pred_logits)
    points_np = np.asarray(pred_points)
    target_classes = np.zeros((B, Q), dtype=np.int64)
    tgt_pts_scat = np.zeros((B, Q, P), dtype=np.float32)
    mask = np.zeros((B, Q), dtype=np.float32)
    for b, (t, (src, tgt)) in enumerate(zip(targets, indices)):
        target_classes[b, src] = np.asarray(t['labels']).reshape(-1)[tgt]
        tgt_pts_scat[b, src] = np.asarray(t['point'], dtype=np.float32)[tgt]
        mask[b, src] = 1.0
    logp = np.asarray(jax.nn.log_softmax(pred_logits, axis=-1))
    nll = -np.take_along_axis(logp, target_classes[..., None], axis=-1)[..., 0]
    w = criterion.empty_weight[target_classes]
    ref_ce = float((w * nll).sum() / w.sum())
    num_boxes = max(float(sum(len(t['labels']) for t in targets)), 1.0)
    ref_pts = float((mask[..., None] * (points_np - tgt_pts_scat) ** 2).sum() / num_boxes)

    assert np.allclose(float(losses['loss_ce']), ref_ce, rtol=1e-5, atol=1e-5), \
        (float(losses['loss_ce']), ref_ce)
    assert np.allclose(float(losses['loss_points']), ref_pts, rtol=1e-5, atol=1e-5), \
        (float(losses['loss_points']), ref_pts)

    print("KERNEL_OK")
</pallas_src>

<mosaic_0001>
module attributes {stable_mosaic.version = 11 : i64} {
  func.func @kernel(%arg0: i32, %arg1: memref<2x2x128xf32, #tpu.memory_space<vmem>>, %arg2: memref<2x2x128xf32, #tpu.memory_space<vmem>>, %arg3: memref<2x2x128xf32, #tpu.memory_space<vmem>>, %arg4: memref<2x128xi32, #tpu.memory_space<vmem>>, %arg5: memref<3xf32, #tpu.memory_space<smem>>) attributes {dimension_semantics = [#tpu.dimension_semantics<arbitrary>], iteration_bounds = array<i64: 1>, scalar_prefetch = 0 : i64, scratch_operands = 0 : i64, tpu.core_type = #tpu.core_type<tc>, window_params = [{transform_indices = @transform_0, window_bounds = array<i64: 2, 2, 128>}, {transform_indices = @transform_1, window_bounds = array<i64: 2, 2, 128>}, {transform_indices = @transform_2, window_bounds = array<i64: 2, 2, 128>}, {transform_indices = @transform_3, window_bounds = array<i64: 2, 128>}, {transform_indices = @transform_4, window_bounds = array<i64: 3>}]} {
    %c0_i32 = arith.constant 0 : i32
    %0 = arith.cmpi eq, %arg0, %c0_i32 : i32
    %1 = arith.extui %0 : i1 to i32
    %c0_i32_0 = arith.constant 0 : i32
    %2 = arith.cmpi ne, %1, %c0_i32_0 : i32
    scf.if %2 {
      %cst_22 = arith.constant 0.000000e+00 : f32
      %c0_23 = arith.constant 0 : index
      %67 = memref.load %arg5[%c0_23] : memref<3xf32, #tpu.memory_space<smem>>
      memref.store %cst_22, %arg5[%c0_23] : memref<3xf32, #tpu.memory_space<smem>>
      %cst_24 = arith.constant 0.000000e+00 : f32
      %c1_25 = arith.constant 1 : index
      %68 = memref.load %arg5[%c1_25] : memref<3xf32, #tpu.memory_space<smem>>
      memref.store %cst_24, %arg5[%c1_25] : memref<3xf32, #tpu.memory_space<smem>>
      %cst_26 = arith.constant 0.000000e+00 : f32
      %c2_27 = arith.constant 2 : index
      %69 = memref.load %arg5[%c2_27] : memref<3xf32, #tpu.memory_space<smem>>
      memref.store %cst_26, %arg5[%c2_27] : memref<3xf32, #tpu.memory_space<smem>>
    } else {
    }
    %c0 = arith.constant 0 : index
    %c0_1 = arith.constant 0 : index
    %c0_2 = arith.constant 0 : index
    %3 = vector.load %arg1[%c0, %c0_1, %c0_2] : memref<2x2x128xf32, #tpu.memory_space<vmem>>, vector<2x2x128xf32>
    %c0_3 = arith.constant 0 : index
    %c0_4 = arith.constant 0 : index
    %4 = vector.load %arg4[%c0_3, %c0_4] : memref<2x128xi32, #tpu.memory_space<vmem>>, vector<2x128xi32>
    %5 = tpu.iota {dimensions = array<i32: 1>} : vector<2x128xi32>
    %c128_i32 = arith.constant 128 : i32
    %6 = arith.muli %arg0, %c128_i32 : i32
    %7 = vector.broadcast %6 : i32 to vector<2x128xi32>
    %8 = arith.addi %5, %7 : vector<2x128xi32>
    %c8_i32 = arith.constant 8 : i32
    %9 = vector.broadcast %c8_i32 : i32 to vector<2x128xi32>
    %10 = arith.cmpi slt, %8, %9 : vector<2x128xi32>
    %11 = arith.extui %10 : vector<2x128xi1> to vector<2x128xi32>
    %12 = arith.sitofp %11 : vector<2x128xi32> to vector<2x128xf32>
    %c0_i32_5 = arith.constant 0 : i32
    %13 = vector.broadcast %c0_i32_5 : i32 to vector<2x128xi32>
    %14 = arith.cmpi ne, %4, %13 : vector<2x128xi32>
    %15 = vector.extract_strided_slice %3 {offsets = [0, 0, 0], sizes = [2, 1, 128], strides = [1, 1, 1]} : vector<2x2x128xf32> to vector<2x1x128xf32>
    %16 = vector.shape_cast %15 : vector<2x1x128xf32> to vector<2x128xf32>
    %17 = vector.extract_strided_slice %3 {offsets = [0, 1, 0], sizes = [2, 1, 128], strides = [1, 1, 1]} : vector<2x2x128xf32> to vector<2x1x128xf32>
    %18 = vector.shape_cast %17 : vector<2x1x128xf32> to vector<2x128xf32>
    %19 = arith.maximumf %16, %18 : vector<2x128xf32>
    %20 = arith.subf %16, %18 : vector<2x128xf32>
    %21 = math.absf %20 : vector<2x128xf32>
    %cst = arith.constant 0.000000e+00 : f32
    %22 = vector.broadcast %cst : f32 to vector<2x128xf32>
    %23 = arith.subf %22, %21 : vector<2x128xf32>
    %24 = math.exp %23 : vector<2x128xf32>
    %cst_6 = arith.constant 1.000000e+00 : f32
    %25 = vector.broadcast %cst_6 : f32 to vector<2x128xf32>
    %26 = arith.addf %25, %24 : vector<2x128xf32>
    %27 = math.log %26 : vector<2x128xf32>
    %28 = arith.addf %19, %27 : vector<2x128xf32>
    %29 = arith.select %14, %18, %16 : vector<2x128xi1>, vector<2x128xf32>
    %30 = arith.subf %28, %29 : vector<2x128xf32>
    %cst_7 = arith.constant 1.000000e+00 : f32
    %cst_8 = arith.constant 5.000000e-01 : f32
    %31 = vector.broadcast %cst_7 : f32 to vector<2x128xf32>
    %32 = vector.broadcast %cst_8 : f32 to vector<2x128xf32>
    %33 = arith.select %14, %31, %32 : vector<2x128xi1>, vector<2x128xf32>
    %34 = arith.mulf %33, %12 : vector<2x128xf32>
    %c0_9 = arith.constant 0 : index
    %35 = memref.load %arg5[%c0_9] : memref<3xf32, #tpu.memory_space<smem>>
    %36 = arith.mulf %34, %30 : vector<2x128xf32>
    %37 = vector.shape_cast %36 : vector<2x128xf32> to vector<1x2x128xf32>
    %cst_10 = arith.constant dense<0.000000e+00> : vector<1xf32>
    %38 = vector.multi_reduction <add>, %37, %cst_10 [1, 2] : vector<1x2x128xf32> to vector<1xf32>
    %39 = vector.shape_cast %38 : vector<1xf32> to vector<1x1x1xf32>
    %40 = vector.extract %39[0, 0, 0] : f32 from vector<1x1x1xf32>
    %41 = arith.addf %35, %40 : f32
    %c0_11 = arith.constant 0 : index
    %42 = memref.load %arg5[%c0_11] : memref<3xf32, #tpu.memory_space<smem>>
    memref.store %41, %arg5[%c0_11] : memref<3xf32, #tpu.memory_space<smem>>
    %c1 = arith.constant 1 : index
    %43 = memref.load %arg5[%c1] : memref<3xf32, #tpu.memory_space<smem>>
    %44 = vector.shape_cast %34 : vector<2x128xf32> to vector<1x2x128xf32>
    %cst_12 = arith.constant dense<0.000000e+00> : vector<1xf32>
    %45 = vector.multi_reduction <add>, %44, %cst_12 [1, 2] : vector<1x2x128xf32> to vector<1xf32>
    %46 = vector.shape_cast %45 : vector<1xf32> to vector<1x1x1xf32>
    %47 = vector.extract %46[0, 0, 0] : f32 from vector<1x1x1xf32>
    %48 = arith.addf %43, %47 : f32
    %c1_13 = arith.constant 1 : index
    %49 = memref.load %arg5[%c1_13] : memref<3xf32, #tpu.memory_space<smem>>
    memref.store %48, %arg5[%c1_13] : memref<3xf32, #tpu.memory_space<smem>>
    %c0_14 = arith.constant 0 : index
    %c0_15 = arith.constant 0 : index
    %c0_16 = arith.constant 0 : index
    %50 = vector.load %arg2[%c0_14, %c0_15, %c0_16] : memref<2x2x128xf32, #tpu.memory_space<vmem>>, vector<2x2x128xf32>
    %c0_17 = arith.constant 0 : index
    %c0_18 = arith.constant 0 : index
    %c0_19 = arith.constant 0 : index
    %51 = vector.load %arg3[%c0_17, %c0_18, %c0_19] : memref<2x2x128xf32, #tpu.memory_space<vmem>>, vector<2x2x128xf32>
    %52 = arith.subf %50, %51 : vector<2x2x128xf32>
    %53 = arith.extui %14 : vector<2x128xi1> to vector<2x128xi32>
    %54 = arith.sitofp %53 : vector<2x128xi32> to vector<2x128xf32>
    %55 = arith.mulf %54, %12 : vector<2x128xf32>
    %56 = vector.shape_cast %55 : vector<2x128xf32> to vector<2x1x128xf32>
    %c2 = arith.constant 2 : index
    %57 = memref.load %arg5[%c2] : memref<3xf32, #tpu.memory_space<smem>>
    %58 = vector.broadcast %56 : vector<2x1x128xf32> to vector<2x2x128xf32>
    %59 = arith.mulf %58, %52 : vector<2x2x128xf32>
    %60 = arith.mulf %59, %52 : vector<2x2x128xf32>
    %61 = vector.shape_cast %60 : vector<2x2x128xf32> to vector<1x2x2x128xf32>
    %cst_20 = arith.constant dense<0.000000e+00> : vector<1xf32>
    %62 = vector.multi_reduction <add>, %61, %cst_20 [1, 2, 3] : vector<1x2x2x128xf32> to vector<1xf32>
    %63 = vector.shape_cast %62 : vector<1xf32> to vector<1x1x1x1xf32>
    %64 = vector.extract %63[0, 0, 0, 0] : f32 from vector<1x1x1x1xf32>
    %65 = arith.addf %57, %64 : f32
    %c2_21 = arith.constant 2 : index
    %66 = memref.load %arg5[%c2_21] : memref<3xf32, #tpu.memory_space<smem>>
    memref.store %65, %arg5[%c2_21] : memref<3xf32, #tpu.memory_space<smem>>
    return
  }
  func.func @transform_0(%arg0: i32) -> (i32, i32, i32) {
    %c0_i32 = arith.constant 0 : i32
    %c0_i32_0 = arith.constant 0 : i32
    %c0_i32_1 = arith.constant 0 : i32
    return %c0_i32, %c0_i32_0, %arg0 : i32, i32, i32
  }
  func.func @transform_1(%arg0: i32) -> (i32, i32, i32) {
    %c0_i32 = arith.constant 0 : i32
    %c0_i32_0 = arith.constant 0 : i32
    %c0_i32_1 = arith.constant 0 : i32
    return %c0_i32, %c0_i32_0, %arg0 : i32, i32, i32
  }
  func.func @transform_2(%arg0: i32) -> (i32, i32, i32) {
    %c0_i32 = arith.constant 0 : i32
    %c0_i32_0 = arith.constant 0 : i32
    %c0_i32_1 = arith.constant 0 : i32
    return %c0_i32, %c0_i32_0, %arg0 : i32, i32, i32
  }
  func.func @transform_3(%arg0: i32) -> (i32, i32) {
    %c0_i32 = arith.constant 0 : i32
    %c0_i32_0 = arith.constant 0 : i32
    return %c0_i32, %arg0 : i32, i32
  }
  func.func @transform_4(%arg0: i32) -> i32 {
    %c0_i32 = arith.constant 0 : i32
    %c0_i32_0 = arith.constant 0 : i32
    return %c0_i32 : i32
  }
}

</mosaic_0001>

<llo_original>
// kernel: tpu_custom_call.1
$region0: #{tpu_custom_call.1}
  #allocation0 [shape = 'u32[]', space=smem, size = 0x4, offset = 0x4, fixed_abs, tag = 'smem constant byte address 0x4 - core index']
  #allocation1 [shape = 'u32[72,128]{1,0:T(1,128)}', space=vmem, size = 0x9000, scoped, tag = 'internal scratch']
  %s0 = inlined_call_operand.hbm [shape: f32[2,2,128], index: 0, kind: input, shape index: {}]
  %s1 = inlined_call_operand.hbm [shape: f32[2,2,128], index: 1, kind: input, shape index: {}]
  %s2 = inlined_call_operand.hbm [shape: f32[2,2,128], index: 2, kind: input, shape index: {}]
  %s3 = inlined_call_operand.vmem [shape: s32[2,128], index: 3, kind: input, shape index: {}]
  %s4 = inlined_call_operand.hbm [shape: f32[3], index: 4, kind: output, shape index: {}]
  %s5 = sld [smem:[#allocation0]]
  $region42: #{tpu_custom_call.1} parent=0
    _
  %s7 = ssub.s32 1, %s5
  %s8 = scalar_select 0, %s7, %s5
  $region1: #{tpu_custom_call.1} parent=0
    #allocation2 [shape = 'u8[2048]{0}', space=vmem, size = 0x800, scoped, tag = 'input window, operand 0, single buffered']
    #allocation3 [shape = 's32[1]{0}', space=sflag, size = 0x4, scoped, tag = 'scoped memory for tpu_custom_call.1']
    #allocation4 [shape = 's32[1]{0}', space=sflag, size = 0x4, scoped, tag = 'scoped memory for tpu_custom_call.1']
    #allocation5 [shape = 'u8[2048]{0}', space=vmem, size = 0x800, scoped, tag = 'input window, operand 1, single buffered']
    #allocation6 [shape = 's32[1]{0}', space=sflag, size = 0x4, scoped, tag = 'scoped memory for tpu_custom_call.1']
    #allocation7 [shape = 'u8[2048]{0}', space=vmem, size = 0x800, scoped, tag = 'input window, operand 2, single buffered']
    #allocation8 [shape = 'u8[512]{0}', space=smem, size = 0x200, scoped, tag = 'output window, operand 0, single buffered']
    %9 = vsyncpa [#allocation3], 0
    %10 = vsyncpa [#allocation6], 0
    %11 = vsyncpa [#allocation4], 0
    // Predicated region
    $region2: #{tpu_custom_call.1} parent=1 // pred_check
      _
    $region3: #{tpu_custom_call.1} parent=1 // pred_check_branch
      %13 = sbr.rel (0) target = $region5
    $region4: #{tpu_custom_call.1} parent=1 // pred_region
      %15 = vsyncadd [#allocation3], 0
      %s16 = sshll.u32 %s0, 4
      %s17 = int_to_ptr.hbm [resolvable:$true] %s16
      %s18 = sshll.u32 [#allocation2], 4
      %s19 = int_to_ptr.vmem [resolvable:$true] %s18
      %24 = dma.hbm_to_vmem [thread:$0]  %s17, 64, %s19, [#allocation3], 32, 32, 2
    $region5: #{tpu_custom_call.1} parent=1 // pred_fallthru
      _
    // Predicated region
    $region6: #{tpu_custom_call.1} parent=1 // pred_check
      _
    $region7: #{tpu_custom_call.1} parent=1 // pred_check_branch
      %26 = sbr.rel (0) target = $region9
    $region8: #{tpu_custom_call.1} parent=1 // pred_region
      %28 = vsyncadd [#allocation6], 0
      %s29 = sshll.u32 %s1, 4
      %s30 = int_to_ptr.hbm [resolvable:$true] %s29
      %s31 = sshll.u32 [#allocation5], 4
      %s32 = int_to_ptr.vmem [resolvable:$true] %s31
      %37 = dma.hbm_to_vmem [thread:$0]  %s30, 64, %s32, [#allocation6], 32, 32, 2
    $region9: #{tpu_custom_call.1} parent=1 // pred_fallthru
      _
    // Predicated region
    $region10: #{tpu_custom_call.1} parent=1 // pred_check
      _
    $region11: #{tpu_custom_call.1} parent=1 // pred_check_branch
      %39 = sbr.rel (0) target = $region13
    $region12: #{tpu_custom_call.1} parent=1 // pred_region
      %41 = vsyncadd [#allocation6], 0
      %s42 = sshll.u32 %s2, 4
      %s43 = int_to_ptr.hbm [resolvable:$true] %s42
      %s44 = sshll.u32 [#allocation7], 4
      %s45 = int_to_ptr.vmem [resolvable:$true] %s44
      %50 = dma.hbm_to_vmem [thread:$0]  %s43, 64, %s45, [#allocation6], 32, 32, 2
    $region13: #{tpu_custom_call.1} parent=1 // pred_fallthru
      _
    // Predicated region
    $region14: #{tpu_custom_call.1} parent=1 // pred_check
      _
    $region15: #{tpu_custom_call.1} parent=1 // pred_check_branch
      %52 = sbr.rel (0) target = $region17
    $region16: #{tpu_custom_call.1} parent=1 // pred_region
      _
    $region17: #{tpu_custom_call.1} parent=1 // pred_fallthru
      _
    // Predicated region
    $region18: #{tpu_custom_call.1} parent=1 // pred_check
      _
    $region19: #{tpu_custom_call.1} parent=1 // pred_check_branch
      %54 = sbr.rel (0) target = $region21
    $region20: #{tpu_custom_call.1} parent=1 // pred_region
      %56 = dma.done [#allocation3], 64
    $region21: #{tpu_custom_call.1} parent=1 // pred_fallthru
      _
    // Predicated region
    $region22: #{tpu_custom_call.1} parent=1 // pred_check
      _
    $region23: #{tpu_custom_call.1} parent=1 // pred_check_branch
      %58 = sbr.rel (0) target = $region25
    $region24: #{tpu_custom_call.1} parent=1 // pred_region
      %60 = dma.done [#allocation6], 64
    $region25: #{tpu_custom_call.1} parent=1 // pred_fallthru
      _
    // Predicated region
    $region26: #{tpu_custom_call.1} parent=1 // pred_check
      _
    $region27: #{tpu_custom_call.1} parent=1 // pred_check_branch
      %62 = sbr.rel (0) target = $region29
    $region28: #{tpu_custom_call.1} parent=1 // pred_region
      %64 = dma.done [#allocation6], 64
    $region29: #{tpu_custom_call.1} parent=1 // pred_fallthru
      _
    %p65 = scmp.eq.s32.totalorder 0, 0
    // Predicated region
    $region30: #{tpu_custom_call.1} parent=1 // pred_check
      %p66 = pneg %p65
    $region31: #{tpu_custom_call.1} parent=1 // pred_check_branch
      %68 = sbr.rel (%p66) target = $region33
    $region32: #{tpu_custom_call.1} parent=1 // pred_region
      %s69 = scalar_lea.smem [#allocation8], 0
      %70 = sst [smem:[%s69]] 0.0
      %s71 = scalar_lea.smem [#allocation8], 1
      %72 = sst [smem:[%s71]] 0.0
      %s73 = scalar_lea.smem [#allocation8], 2
      %74 = sst [smem:[%s73]] 0.0
    $region33: #{tpu_custom_call.1} parent=1 // pred_fallthru
      _
    %v75 = vld [vmem:[#allocation2] sm:$0x3]
    %v76 = vld [vmem:[#allocation2 + $0x2] sm:$0x3]
    %v77 = vld [vmem:[%s3] sm:$0x3]
    %v78 = vlaneseq
    %v79 = vand.u32 %v78, 127
    %s80 = smul.u32 0, 128
    %v81 = vstv %s80
    %v82 = vadd.s32 %v79, %v81
    %vm83 = vcmp.lt.s32.totalorder %v82, 8
    %v84 = vsel %vm83, 1, 0
    %v85 = vcvt.s32.f32 %v84
    %vm86 = vcmp.ne.s32.totalorder %v77, 0
    %v89 = vrot.slane %v75, 1
    %v90 = vrot.slane %v76, 1
    %v93 = vmax.f32 %v75, %v89
    %v94 = vmax.f32 %v76, %v90
    %v95 = vsub.f32 %v75, %v89
    %v96 = vsub.f32 %v76, %v90
    %v97 = vand.u32 2147483647, %v95
    %v98 = vand.u32 2147483647, %v96
    %v99 = vsub.f32 0.0, %v97
    %v100 = vsub.f32 0.0, %v98
    %v101 = vmul.f32 %v99, 1.442695
    %v102 = vpow.pop %v101
    %v103 = vmul.f32 %v100, 1.442695
    %v104 = vpow.pop %v103
    %v105 = vadd.f32 %v102, 1.0
    %v106 = vadd.f32 %v104, 1.0
    %v107 = vlog2.pop %v105
    %v108 = vmul.f32 %v107, 0.6931472
    %v109 = vlog2.pop %v106
    %v110 = vmul.f32 %v109, 0.6931472
    %v111 = vadd.f32 %v93, %v108
    %v112 = vadd.f32 %v94, %v110
    %vm113 = vcmask 1041409
    %v114 = vsel %vm113, %v76, %v89
    %v116 = vrot.slane %v76, 7
    %v117 = vsel %vm113, %v116, %v75
    %v119 = vsel %vm86, %v114, %v117
    %v121 = vrot.slane %v119, 1
    %v124 = vsub.f32 %v111, %v119
    %v125 = vsub.f32 %v112, %v121
    %v126 = vsel %vm86, 1.0, 0.5
    %v127 = vmul.f32 %v126, %v85
    %s128 = sld [smem:[#allocation8]]
    %v131 = vrot.slane %v125, 7
    %v132 = vsel %vm113, %v131, %v124
    %v134 = vmul.f32 %v127, %v132
    %vm135 = vcmask 1041408
    %v136 = vsel %vm135, %v134, 0.0
    %137 = vadd.xlane.f32.xlu0 %v136
    %v138 = vpop.xlane.xlu0 %137
    %v139 = vrot.slane %v138, 4
    %v140 = vadd.f32 %v138, %v139
    %v141 = vrot.slane %v140, 2
    %v142 = vadd.f32 %v140, %v141
    %v143 = vrot.slane %v142, 1
    %v144 = vadd.f32 %v142, %v143
    %s145 = vtos %v144
    %s146 = sadd.f32 %s128, %s145
    %s147 = scalar_lea.smem [#allocation8], 0
    %148 = sst [smem:[%s147]] %s146
    %s149 = sld [smem:[#allocation8 + $0x1]]
    %v150 = vsel %vm135, %v127, 0.0
    %151 = vadd.xlane.f32.xlu0 %v150
    %v152 = vpop.xlane.xlu0 %151
    %v153 = vrot.slane %v152, 4
    %v154 = vadd.f32 %v152, %v153
    %v155 = vrot.slane %v154, 2
    %v156 = vadd.f32 %v154, %v155
    %v157 = vrot.slane %v156, 1
    %v158 = vadd.f32 %v156, %v157
    %s159 = vtos %v158
    %s160 = sadd.f32 %s149, %s159
    %s161 = scalar_lea.smem [#allocation8], 1
    %162 = sst [smem:[%s161]] %s160
    %v163 = vld [vmem:[#allocation5] sm:$0x3]
    %v164 = vld [vmem:[#allocation5 + $0x2] sm:$0x3]
    %v165 = vld [vmem:[#allocation7] sm:$0x3]
    %v166 = vld [vmem:[#allocation7 + $0x2] sm:$0x3]
    %v167 = vsub.f32 %v163, %v165
    %v168 = vsub.f32 %v164, %v166
    %v169 = vsel %vm86, 1, 0
    %v170 = vcvt.s32.f32 %v169
    %v171 = vmul.f32 %v170, %v85
    %v173 = vrot.slane %v171, 1
    %s174 = sld [smem:[#allocation8 + $0x2]]
    %v175 = vperm.slane %v171, 0
    %v176 = vperm.slane %v173, 0
    %v179 = vmul.f32 %v175, %v167
    %v180 = vmul.f32 %v176, %v168
    %v181 = vmul.f32 %v179, %v167
    %v182 = vmul.f32 %v180, %v168
    %v183 = vsel %vm135, %v181, 0.0
    %v184 = vsel %vm135, %v182, 0.0
    %v185 = vadd.f32 %v183, %v184
    %186 = vadd.xlane.f32.xlu0 %v185
    %v187 = vpop.xlane.xlu0 %186
    %v188 = vrot.slane %v187, 4
    %v189 = vadd.f32 %v187, %v188
    %v190 = vrot.slane %v189, 2
    %v191 = vadd.f32 %v189, %v190
    %v192 = vrot.slane %v191, 1
    %v193 = vadd.f32 %v191, %v192
    %s194 = vtos %v193
    %s195 = sadd.f32 %s174, %s194
    %s196 = scalar_lea.smem [#allocation8], 2
    %197 = sst [smem:[%s196]] %s195
    // Predicated region
    $region34: #{tpu_custom_call.1} parent=1 // pred_check
      _
    $region35: #{tpu_custom_call.1} parent=1 // pred_check_branch
      %199 = sbr.rel (0) target = $region37
    $region36: #{tpu_custom_call.1} parent=1 // pred_region
      %201 = vsyncadd [#allocation4], 0
      %s203 = sshll.u32 %s4, 4
      %s204 = int_to_ptr.hbm [resolvable:$true] %s203
      %206 = dma.smem_to_hbm [#allocation8], 16, %s204, [#allocation4]
    $region37: #{tpu_custom_call.1} parent=1 // pred_fallthru
      _
    // Predicated region
    $region38: #{tpu_custom_call.1} parent=1 // pred_check
      _
    $region39: #{tpu_custom_call.1} parent=1 // pred_check_branch
      %208 = sbr.rel (0) target = $region41
    $region40: #{tpu_custom_call.1} parent=1 // pred_region
      %210 = dma.done [#allocation4], 16
    $region41: #{tpu_custom_call.1} parent=1 // pred_fallthru
      _
    %211 = sfence
    %212 = vsyncpa [#allocation3], 1
    %213 = vsyncpa [#allocation6], 1
    %214 = vsyncpa [#allocation4], 1

</llo_original>
